<compile_context>
chip_gen: v6e
topology: v6e:2x2x1
jax: 0.10.0
libtpu: 0.0.40
codegen_flags: <defaults>
</compile_context>

<pallas_src>
import jax
import jax.numpy as jnp
from jax.experimental import pallas as pl
from jax.experimental.pallas import tpu as pltpu

_LANE = 128
_N_STREAMS = 5                      # 2 inputs + 3 outputs
_MIN_PALLAS_BYTES = 512 * 1024      # below this per-input size, fused jnp wins


def _linking_kernel(a_ref, b_ref, out0_ref, out1_ref, out2_ref):
    a = a_ref[...]
    b = b_ref[...]
    # path(a, b) computed once; each model output is 2x the path result.
    r0 = a + b
    r1 = r0 * b
    o0 = r0 + r0                    # 2 * r0
    o1 = r1 + r1                    # 2 * r1
    out0_ref[...] = o0
    out1_ref[...] = o1
    out2_ref[...] = o0 + o1         # 2 * (r0 + r1) == 2 * r2


def _linking_jnp(a, b):
    """Fused pure-jnp path for tiny / degenerate inputs (XLA fuses this)."""
    r0 = a + b
    r1 = r0 * b
    o0 = r0 + r0
    o1 = r1 + r1
    return o0, o1, o0 + o1


def _pallas_config():
    """Derive (tile_bytes, vmem_limit_bytes) from queried VMEM capacity."""
    try:
        vmem_cap = int(pltpu.get_tpu_info().vmem_capacity_bytes)
    except Exception:
        vmem_cap = 64 << 20         # conservative: smallest per-core VMEM (v7x)
    # Keep 5 streams x 2 pipeline buffers + ~4 MiB compiler headroom inside
    # min(physical/2, 40 MiB) of scoped VMEM on every generation.
    vmem_limit = min(vmem_cap // 2, 40 << 20)
    headroom = 4 << 20
    tile_bytes = max(1 << 20, (vmem_limit - headroom) // (2 * _N_STREAMS))
    return tile_bytes, vmem_limit


def quantizer_linking_forward(input_1, input_2, *,
                              min_pallas_bytes=_MIN_PALLAS_BYTES):
    """Forward pass of QuantizerLinkingTestModel.

    Args:
      input_1, input_2: arrays of identical shape and dtype (e.g. NCHW).
      min_pallas_bytes: per-input byte threshold below which the fused jnp
        path is used instead of pallas_call (set 0 to force the kernel).
    Returns:
      Tuple of 3 arrays, same shape/dtype as the inputs.
    """
    assert input_1.shape == input_2.shape
    assert input_1.dtype == input_2.dtype
    shape = input_1.shape
    dtype = input_1.dtype
    itemsize = jnp.dtype(dtype).itemsize
    # Minimum sublane multiple per dtype width (f32: 8, bf16: 16, int8: 32).
    min_sublane = {4: 8, 2: 16, 1: 32}.get(itemsize, 8)

    n_elem = 1
    for d in shape:
        n_elem *= d

    # Tiny inputs: pallas_call setup + per-step overhead dominates and XLA
    # fuses these 5 elementwise ops into a single pass anyway.
    if n_elem == 0 or n_elem * itemsize < min_pallas_bytes:
        return _linking_jnp(input_1, input_2)

    tile_bytes, vmem_limit = _pallas_config()

    if n_elem % _LANE == 0:
        # Lane-dense slab: pure reshape, zero extra HBM traffic.
        rows, cols = n_elem // _LANE, _LANE
    elif len(shape) >= 2:
        # Unaligned total element count: keep the trailing dim and tile over
        # the leading rows.  The partial last grid block is clipped by Pallas
        # itself -- no jnp.pad / output-slice copies (no extra HBM passes).
        rows, cols = n_elem // shape[-1], shape[-1]
    else:
        # Degenerate: large 1-D array whose length is not a multiple of 128.
        # TODO(synk): handle via an in-kernel lane mask; fused jnp is fine.
        return _linking_jnp(input_1, input_2)

    a2d = input_1.reshape(rows, cols)
    b2d = input_2.reshape(rows, cols)

    # Per-row VMEM footprint (lanes are padded to 128 in VMEM layout).
    row_bytes = pl.cdiv(cols, _LANE) * _LANE * itemsize
    tr_cap = max(min_sublane,
                 (tile_bytes // row_bytes) // min_sublane * min_sublane)

    if rows <= tr_cap:
        if rows > 2 * min_sublane:
            # Force >= 2 grid steps so "parallel" shards work across both
            # TensorCores on v7x (no-op on single-TC v5e/v6e).
            tr = pl.cdiv(pl.cdiv(rows, 2), min_sublane) * min_sublane
        else:
            tr = rows               # trivial size: single full-extent block
    else:
        tr = tr_cap

    # Safety valve: absurdly wide trailing dim could make even one
    # min_sublane-row block overflow the scoped-VMEM budget.
    if 2 * _N_STREAMS * tr * row_bytes > vmem_limit:
        return _linking_jnp(input_1, input_2)

    grid = (pl.cdiv(rows, tr),)
    spec = pl.BlockSpec((tr, cols), lambda i: (i, 0))
    out_sds = jax.ShapeDtypeStruct((rows, cols), dtype)

    out0, out1, out2 = pl.pallas_call(
        _linking_kernel,
        out_shape=(out_sds, out_sds, out_sds),
        grid=grid,
        in_specs=[spec, spec],
        out_specs=(spec, spec, spec),
        compiler_params=pltpu.CompilerParams(
            dimension_semantics=("parallel",),
            vmem_limit_bytes=vmem_limit,
        ),
    )(a2d, b2d)

    # rows * cols == n_elem always (no padding), so reshape back is free.
    return (out0.reshape(shape), out1.reshape(shape), out2.reshape(shape))


if __name__ == "__main__":
    # Deterministic "parameter" (unused in forward, as in the PyTorch module).
    _dummy_trainable_param = jnp.ones([1], jnp.float32)

    def reference(a, b):
        r0 = a + b
        r1 = r0 * b
        r2 = r0 + r1
        return (r0 + r0, r1 + r1, r2 + r2)

    def check(a, b, **kw):
        outs = jax.block_until_ready(quantizer_linking_forward(a, b, **kw))
        refs = reference(a, b)
        for o, r in zip(outs, refs):
            assert o.shape == r.shape and o.dtype == r.dtype
            assert jnp.allclose(o, r, atol=1e-6, rtol=1e-6), "mismatch vs ref"

    k = jax.random.PRNGKey(0)
    k1, k2, k3, k4, k5, k6 = jax.random.split(k, 6)

    # Module-consistent toy shape (8 KiB -> tiny path: fused jnp, no Pallas).
    x1 = jax.random.normal(k1, (2, 4, 16, 16), jnp.float32)  # NCHW
    x2 = jax.random.normal(k2, (2, 4, 16, 16), jnp.float32)  # NCHW
    check(x1, x2)

    # Same shape forced through the Pallas kernel (aligned (rows, 128) slab).
    check(x1, x2, min_pallas_bytes=0)

    # Unaligned element count forced through Pallas (2-D fallback, clipped
    # partial last grid block, no pad/slice copies).
    y1 = jax.random.normal(k3, (3, 5, 24, 24), jnp.float32)
    y2 = jax.random.normal(k4, (3, 5, 24, 24), jnp.float32)
    check(y1, y2, min_pallas_bytes=0)

    # Larger aligned input taking the default Pallas path with >= 2 grid
    # steps (exercises the double-buffered pipeline and megacore split).
    z1 = jax.random.normal(k5, (2, 64, 128, 128), jnp.float32)
    z2 = jax.random.normal(k6, (2, 64, 128, 128), jnp.float32)
    check(z1, z2)

    print("KERNEL_OK")
</pallas_src>

<mosaic_0001>
module attributes {stable_mosaic.version = 11 : i64} {
  func.func @_linking_kernel(%arg0: i32, %arg1: memref<16x128xf32, #tpu.memory_space<vmem>>, %arg2: memref<16x128xf32, #tpu.memory_space<vmem>>, %arg3: memref<16x128xf32, #tpu.memory_space<vmem>>, %arg4: memref<16x128xf32, #tpu.memory_space<vmem>>, %arg5: memref<16x128xf32, #tpu.memory_space<vmem>>) attributes {dimension_semantics = [#tpu.dimension_semantics<parallel>], iteration_bounds = array<i64: 1>, scalar_prefetch = 0 : i64, scratch_operands = 0 : i64, tpu.core_type = #tpu.core_type<tc>, window_params = [{transform_indices = @transform_0, window_bounds = array<i64: 16, 128>}, {transform_indices = @transform_1, window_bounds = array<i64: 16, 128>}, {transform_indices = @transform_2, window_bounds = array<i64: 16, 128>}, {transform_indices = @transform_3, window_bounds = array<i64: 16, 128>}, {transform_indices = @transform_4, window_bounds = array<i64: 16, 128>}]} {
    %c0 = arith.constant 0 : index
    %c0_0 = arith.constant 0 : index
    %0 = vector.load %arg1[%c0, %c0_0] : memref<16x128xf32, #tpu.memory_space<vmem>>, vector<16x128xf32>
    %c0_1 = arith.constant 0 : index
    %c0_2 = arith.constant 0 : index
    %1 = vector.load %arg2[%c0_1, %c0_2] : memref<16x128xf32, #tpu.memory_space<vmem>>, vector<16x128xf32>
    %2 = arith.addf %0, %1 : vector<16x128xf32>
    %3 = arith.mulf %2, %1 : vector<16x128xf32>
    %4 = arith.addf %2, %2 : vector<16x128xf32>
    %5 = arith.addf %3, %3 : vector<16x128xf32>
    %c0_3 = arith.constant 0 : index
    %c0_4 = arith.constant 0 : index
    %6 = vector.load %arg3[%c0_3, %c0_4] : memref<16x128xf32, #tpu.memory_space<vmem>>, vector<16x128xf32>
    tpu.vector_store %arg3[%c0_3, %c0_4], %4 {strides = array<i32>} : memref<16x128xf32, #tpu.memory_space<vmem>>, vector<16x128xf32>,
    %c0_5 = arith.constant 0 : index
    %c0_6 = arith.constant 0 : index
    %7 = vector.load %arg4[%c0_5, %c0_6] : memref<16x128xf32, #tpu.memory_space<vmem>>, vector<16x128xf32>
    tpu.vector_store %arg4[%c0_5, %c0_6], %5 {strides = array<i32>} : memref<16x128xf32, #tpu.memory_space<vmem>>, vector<16x128xf32>,
    %8 = arith.addf %4, %5 : vector<16x128xf32>
    %c0_7 = arith.constant 0 : index
    %c0_8 = arith.constant 0 : index
    %9 = vector.load %arg5[%c0_7, %c0_8] : memref<16x128xf32, #tpu.memory_space<vmem>>, vector<16x128xf32>
    tpu.vector_store %arg5[%c0_7, %c0_8], %8 {strides = array<i32>} : memref<16x128xf32, #tpu.memory_space<vmem>>, vector<16x128xf32>,
    return
  }
  func.func @transform_0(%arg0: i32) -> (i32, i32) {
    %c0_i32 = arith.constant 0 : i32
    %c0_i32_0 = arith.constant 0 : i32
    return %arg0, %c0_i32 : i32, i32
  }
  func.func @transform_1(%arg0: i32) -> (i32, i32) {
    %c0_i32 = arith.constant 0 : i32
    %c0_i32_0 = arith.constant 0 : i32
    return %arg0, %c0_i32 : i32, i32
  }
  func.func @transform_2(%arg0: i32) -> (i32, i32) {
    %c0_i32 = arith.constant 0 : i32
    %c0_i32_0 = arith.constant 0 : i32
    return %arg0, %c0_i32 : i32, i32
  }
  func.func @transform_3(%arg0: i32) -> (i32, i32) {
    %c0_i32 = arith.constant 0 : i32
    %c0_i32_0 = arith.constant 0 : i32
    return %arg0, %c0_i32 : i32, i32
  }
  func.func @transform_4(%arg0: i32) -> (i32, i32) {
    %c0_i32 = arith.constant 0 : i32
    %c0_i32_0 = arith.constant 0 : i32
    return %arg0, %c0_i32 : i32, i32
  }
}

</mosaic_0001>

<llo_original>
// kernel: tpu_custom_call.1
$region0: #{tpu_custom_call.1}
  #allocation0 [shape = 'u32[]', space=smem, size = 0x4, offset = 0x4, fixed_abs, tag = 'smem constant byte address 0x4 - core index']
  #allocation1 [shape = 'u32[144,128]{1,0:T(1,128)}', space=vmem, size = 0x12000, scoped, tag = 'internal scratch']
  %s0 = inlined_call_operand.hbm [shape: f32[16,128], index: 0, kind: input, shape index: {}]
  %s1 = inlined_call_operand.hbm [shape: f32[16,128], index: 1, kind: input, shape index: {}]
  %s2 = inlined_call_operand.hbm [shape: f32[16,128], index: 2, kind: output, shape index: {0}]
  %s3 = inlined_call_operand.hbm [shape: f32[16,128], index: 3, kind: output, shape index: {1}]
  %s4 = inlined_call_operand.hbm [shape: f32[16,128], index: 4, kind: output, shape index: {2}]
  %5 = xla_tuple %s2, %s3, %s4
  %s6 = sld [smem:[#allocation0]]
  $region42: #{tpu_custom_call.1} parent=0
    _
  %s8 = ssub.s32 1, %s6
  %s9 = scalar_select 0, %s8, %s6
  $region1: #{tpu_custom_call.1} parent=0
    #allocation2 [shape = 'u8[8192]{0}', space=vmem, size = 0x2000, scoped, tag = 'input window, operand 0, single buffered']
    #allocation3 [shape = 's32[1]{0}', space=sflag, size = 0x4, scoped, tag = 'scoped memory for tpu_custom_call.1']
    #allocation4 [shape = 's32[1]{0}', space=sflag, size = 0x4, scoped, tag = 'scoped memory for tpu_custom_call.1']
    #allocation5 [shape = 'u8[8192]{0}', space=vmem, size = 0x2000, scoped, tag = 'input window, operand 1, single buffered']
    #allocation6 [shape = 's32[1]{0}', space=sflag, size = 0x4, scoped, tag = 'scoped memory for tpu_custom_call.1']
    #allocation7 [shape = 'u8[8192]{0}', space=vmem, size = 0x2000, scoped, tag = 'output window, operand 0, single buffered']
    #allocation8 [shape = 'u8[8192]{0}', space=vmem, size = 0x2000, scoped, tag = 'output window, operand 1, single buffered']
    #allocation9 [shape = 's32[1]{0}', space=sflag, size = 0x4, scoped, tag = 'scoped memory for tpu_custom_call.1']
    #allocation10 [shape = 'u8[8192]{0}', space=vmem, size = 0x2000, scoped, tag = 'output window, operand 2, single buffered']
    %10 = vsyncpa [#allocation3], 0
    %11 = vsyncpa [#allocation6], 0
    %12 = vsyncpa [#allocation4], 0
    %13 = vsyncpa [#allocation9], 0
    // Predicated region
    $region2: #{tpu_custom_call.1} parent=1 // pred_check
      _
    $region3: #{tpu_custom_call.1} parent=1 // pred_check_branch
      %15 = sbr.rel (0) target = $region5
    $region4: #{tpu_custom_call.1} parent=1 // pred_region
      %s17 = ssub.s32 256, 256
      %18 = vsyncadd [#allocation3], %s17
      %s19 = sshll.u32 [#allocation2], 4
      %s20 = int_to_ptr.vmem [resolvable:$true] %s19
      %25 = dma.hbm_to_vmem [thread:$0]  %s0, 256, %s20, [#allocation3], 128, 128, 8
    $region5: #{tpu_custom_call.1} parent=1 // pred_fallthru
      _
    // Predicated region
    $region6: #{tpu_custom_call.1} parent=1 // pred_check
      _
    $region7: #{tpu_custom_call.1} parent=1 // pred_check_branch
      %27 = sbr.rel (0) target = $region9
    $region8: #{tpu_custom_call.1} parent=1 // pred_region
      %s29 = ssub.s32 256, 256
      %30 = vsyncadd [#allocation6], %s29
      %s31 = sshll.u32 [#allocation5], 4
      %s32 = int_to_ptr.vmem [resolvable:$true] %s31
      %37 = dma.hbm_to_vmem [thread:$0]  %s1, 256, %s32, [#allocation6], 128, 128, 8
    $region9: #{tpu_custom_call.1} parent=1 // pred_fallthru
      _
    // Predicated region
    $region10: #{tpu_custom_call.1} parent=1 // pred_check
      _
    $region11: #{tpu_custom_call.1} parent=1 // pred_check_branch
      %39 = sbr.rel (0) target = $region13
    $region12: #{tpu_custom_call.1} parent=1 // pred_region
      %40 = dma.done [#allocation3], 256
    $region13: #{tpu_custom_call.1} parent=1 // pred_fallthru
      _
    // Predicated region
    $region14: #{tpu_custom_call.1} parent=1 // pred_check
      _
    $region15: #{tpu_custom_call.1} parent=1 // pred_check_branch
      %42 = sbr.rel (0) target = $region17
    $region16: #{tpu_custom_call.1} parent=1 // pred_region
      %43 = dma.done [#allocation6], 256
    $region17: #{tpu_custom_call.1} parent=1 // pred_fallthru
      _
    %v44 = vld [vmem:[#allocation2] sm:$0xff]
    %v45 = vld [vmem:[#allocation2 + $0x8] sm:$0xff]
    %v46 = vld [vmem:[#allocation5] sm:$0xff]
    %v47 = vld [vmem:[#allocation5 + $0x8] sm:$0xff]
    %v48 = vadd.f32 %v44, %v46
    %v49 = vadd.f32 %v45, %v47
    %v50 = vmul.f32 %v48, %v46
    %v51 = vmul.f32 %v49, %v47
    %v52 = vadd.f32 %v48, %v48
    %v53 = vadd.f32 %v49, %v49
    %v54 = vadd.f32 %v50, %v50
    %v55 = vadd.f32 %v51, %v51
    %56 = vst [vmem:[#allocation7] sm:$0xff] %v52
    %57 = vst [vmem:[#allocation7 + $0x8] sm:$0xff] %v53
    %58 = vst [vmem:[#allocation8] sm:$0xff] %v54
    %59 = vst [vmem:[#allocation8 + $0x8] sm:$0xff] %v55
    %v60 = vadd.f32 %v52, %v54
    %v61 = vadd.f32 %v53, %v55
    %62 = vst [vmem:[#allocation10] sm:$0xff] %v60
    %63 = vst [vmem:[#allocation10 + $0x8] sm:$0xff] %v61
    // Predicated region
    $region18: #{tpu_custom_call.1} parent=1 // pred_check
      _
    $region19: #{tpu_custom_call.1} parent=1 // pred_check_branch
      %65 = sbr.rel (0) target = $region21
    $region20: #{tpu_custom_call.1} parent=1 // pred_region
      %s67 = ssub.s32 256, 256
      %68 = vsyncadd [#allocation4], %s67
      %s69 = sshll.u32 [#allocation7], 4
      %s70 = int_to_ptr.vmem [resolvable:$true] %s69
      %75 = dma.vmem_to_hbm [thread:$0]  %s70, 256, %s2, [#allocation4], 128, 128, 8
    $region21: #{tpu_custom_call.1} parent=1 // pred_fallthru
      _
    // Predicated region
    $region22: #{tpu_custom_call.1} parent=1 // pred_check
      _
    $region23: #{tpu_custom_call.1} parent=1 // pred_check_branch
      %77 = sbr.rel (0) target = $region25
    $region24: #{tpu_custom_call.1} parent=1 // pred_region
      %s79 = ssub.s32 256, 256
      %80 = vsyncadd [#allocation9], %s79
      %s81 = sshll.u32 [#allocation8], 4
      %s82 = int_to_ptr.vmem [resolvable:$true] %s81
      %87 = dma.vmem_to_hbm [thread:$0]  %s82, 256, %s3, [#allocation9], 128, 128, 8
    $region25: #{tpu_custom_call.1} parent=1 // pred_fallthru
      _
    // Predicated region
    $region26: #{tpu_custom_call.1} parent=1 // pred_check
      _
    $region27: #{tpu_custom_call.1} parent=1 // pred_check_branch
      %89 = sbr.rel (0) target = $region29
    $region28: #{tpu_custom_call.1} parent=1 // pred_region
      %s91 = ssub.s32 256, 256
      %92 = vsyncadd [#allocation9], %s91
      %s93 = sshll.u32 [#allocation10], 4
      %s94 = int_to_ptr.vmem [resolvable:$true] %s93
      %99 = dma.vmem_to_hbm [thread:$0]  %s94, 256, %s4, [#allocation9], 128, 128, 8
    $region29: #{tpu_custom_call.1} parent=1 // pred_fallthru
      _
    // Predicated region
    $region30: #{tpu_custom_call.1} parent=1 // pred_check
      _
    $region31: #{tpu_custom_call.1} parent=1 // pred_check_branch
      %101 = sbr.rel (0) target = $region33
    $region32: #{tpu_custom_call.1} parent=1 // pred_region
      %102 = dma.done [#allocation4], 256
    $region33: #{tpu_custom_call.1} parent=1 // pred_fallthru
      _
    // Predicated region
    $region34: #{tpu_custom_call.1} parent=1 // pred_check
      _
    $region35: #{tpu_custom_call.1} parent=1 // pred_check_branch
      %104 = sbr.rel (0) target = $region37
    $region36: #{tpu_custom_call.1} parent=1 // pred_region
      %105 = dma.done [#allocation9], 256
    $region37: #{tpu_custom_call.1} parent=1 // pred_fallthru
      _
    // Predicated region
    $region38: #{tpu_custom_call.1} parent=1 // pred_check
      _
    $region39: #{tpu_custom_call.1} parent=1 // pred_check_branch
      %107 = sbr.rel (0) target = $region41
    $region40: #{tpu_custom_call.1} parent=1 // pred_region
      %108 = dma.done [#allocation9], 256
    $region41: #{tpu_custom_call.1} parent=1 // pred_fallthru
      _
    %109 = vsyncpa [#allocation3], 1
    %110 = vsyncpa [#allocation6], 1
    %111 = vsyncpa [#allocation4], 1
    %112 = vsyncpa [#allocation9], 1

</llo_original>
